<compile_context>
chip_gen: v6e
topology: v6e:2x2x1
jax: 0.10.0
libtpu: 0.0.40
codegen_flags: <defaults>
</compile_context>

<pallas_src>
import math
from functools import partial

import numpy as np
import jax
import jax.numpy as jnp
from jax import lax
from jax.experimental import pallas as pl
from jax.experimental.pallas import tpu as pltpu

# ----------------- small config, consistent with the module defaults ----------
BATCH = 2
IN_CHANNELS = 3
OUT_CHANNELS = 16
IMAGE_SIZE = 32          # module default 224, scaled down
KERNEL_SIZE = 7          # module default 25
STRIDE = 2               # module default 4
VISUAL_DEGREES = 8
PAD = KERNEL_SIZE // 2


# ----------------- deterministic Gabor init (numpy, module-faithful) ----------
def sample_dist(hist, bins, ns, scale='linear'):
    rand_sample = np.random.rand(ns)
    if scale == 'linear':
        rand_sample = np.interp(rand_sample, np.hstack(([0], hist.cumsum())), bins)
    elif scale == 'log2':
        rand_sample = np.interp(rand_sample, np.hstack(([0], hist.cumsum())), np.log2(bins))
        rand_sample = 2 ** rand_sample
    elif scale == 'log10':
        rand_sample = np.interp(rand_sample, np.hstack(([0], hist.cumsum())), np.log10(bins))
        rand_sample = 10 ** rand_sample
    return rand_sample


def _norm_cdf(a):
    flat = np.array([math.erf(v / math.sqrt(2.0)) for v in np.ravel(a)])
    return (0.5 * (1.0 + flat)).reshape(np.shape(a))


def generate_gabor_parameters(features, sf_corr=0.75, sf_max=9, sf_min=0):
    phase_bins = np.array([0, 360])
    phase_dist = np.array([1])
    ori_bins = np.array([-22.5, 22.5, 67.5, 112.5, 157.5])
    ori_dist = np.array([66, 49, 77, 54], dtype=np.float64)
    ori_dist = ori_dist / ori_dist.sum()
    cov_mat = np.array([[1, sf_corr], [sf_corr, 1]])
    nx_bins = np.logspace(-1, 0.2, 6, base=10)
    ny_bins = np.logspace(-1, 0.2, 6, base=10)
    n_joint_dist = np.array([[2.0, 0.0, 1.0, 0.0, 0.0],
                             [8.0, 9.0, 4.0, 1.0, 0.0],
                             [1.0, 2.0, 19.0, 17.0, 3.0],
                             [0.0, 0.0, 1.0, 7.0, 4.0],
                             [0.0, 0.0, 0.0, 0.0, 0.0]])
    n_joint_dist = n_joint_dist / n_joint_dist.sum()
    nx_dist = n_joint_dist.sum(axis=1)
    nx_dist = nx_dist / nx_dist.sum()
    with np.errstate(invalid='ignore', divide='ignore'):
        ny_dist_marg = n_joint_dist / n_joint_dist.sum(axis=1, keepdims=True)
    sf_bins = np.array([0.5, 0.7, 1.0, 1.4, 2.0, 2.8, 4.0, 5.6, 8])
    sf_dist = np.array([4, 4, 8, 25, 32, 26, 28, 12], dtype=np.float64)
    sfmax_ind = np.where(sf_bins <= sf_max)[0][-1]
    sfmin_ind = np.where(sf_bins >= sf_min)[0][0]
    sf_bins = sf_bins[sfmin_ind:sfmax_ind + 1]
    sf_dist = sf_dist[sfmin_ind:sfmax_ind]
    sf_dist = sf_dist / sf_dist.sum()

    phase = sample_dist(phase_dist, phase_bins, features)
    ori = sample_dist(ori_dist, ori_bins, features)
    ori[ori < 0] = ori[ori < 0] + 180

    samps = np.random.multivariate_normal([0, 0], cov_mat, features)
    samps_cdf = _norm_cdf(samps)
    nx = np.interp(samps_cdf[:, 0], np.hstack(([0], nx_dist.cumsum())), np.log10(nx_bins))
    nx = 10 ** nx
    ny_samp = np.random.rand(features)
    ny = np.zeros(features)
    for samp_ind, nx_samp in enumerate(nx):
        bin_id = np.argwhere(nx_bins < nx_samp)[-1]
        ny[samp_ind] = np.interp(ny_samp[samp_ind],
                                 np.hstack(([0], ny_dist_marg[bin_id, :].cumsum())),
                                 np.log10(ny_bins))
    ny = 10 ** ny
    sf = np.interp(samps_cdf[:, 1], np.hstack(([0], sf_dist.cumsum())), np.log2(sf_bins))
    sf = 2 ** sf
    return sf, ori, phase, nx, ny


def gabor_kernel_np(kernel_size, freq, sigma_x, sigma_y, theta, offset):
    w = kernel_size // 2
    grid_val = np.arange(-w, w + 1, dtype=np.float64)
    x, y = np.meshgrid(grid_val, grid_val, indexing='ij')
    rotx = x * np.cos(theta) + y * np.sin(theta)
    roty = -x * np.sin(theta) + y * np.cos(theta)
    g = np.exp(-0.5 * (rotx ** 2 / sigma_x ** 2 + roty ** 2 / sigma_y ** 2))
    g = g / (2 * np.pi * sigma_x * sigma_y)
    g = g * np.cos(2 * np.pi * freq * rotx + offset)
    return g.astype(np.float32)


def make_gabor_bank_weights(in_channels, out_channels, image_size, kernel_size, visual_degrees):
    """Reproduces GaborFilterBank.initialize(): (OC, Cin, k, k) fixed weight bank."""
    ppd = image_size / visual_degrees
    sf, theta, phase, sigx, sigy = generate_gabor_parameters(out_channels)
    sf = sf / ppd
    sigx = sigx / sf
    sigy = sigy / sf
    theta = theta * np.pi / 180.0
    phase = phase * np.pi / 180.0
    random_channel = np.random.randint(0, in_channels, (out_channels,))
    w = np.zeros((out_channels, in_channels, kernel_size, kernel_size), dtype=np.float32)
    for i in range(out_channels):
        w[i, random_channel[i]] = gabor_kernel_np(kernel_size, sf[i], sigx[i], sigy[i],
                                                  theta[i], phase[i])
    return w


# ------------------------------- Pallas kernel -------------------------------
def gabor_conv_kernel(p_ref, w_ref, o_ref):
    # p_ref : (K, tp)  bf16  channel-major im2col patches (pixels on the lane axis)
    # w_ref : (OC, K)  bf16  Gabor weight bank, resident across grid steps
    # o_ref : (OC, tp) f32   lane-dense output tile, already in NCHW channel order
    o_ref[...] = jnp.dot(w_ref[...], p_ref[...], preferred_element_type=jnp.float32)


# ------------------------------- JAX glue ------------------------------------
def _round_up(a, b):
    return (a + b - 1) // b * b


def im2col_channel_major(x, kh, kw, stride, pad):
    """x (B, C, H, W) -> patches (B, C*kh*kw, Ho*Wo), channel-major reduction dim."""
    B, C, H, W = x.shape
    Ho = (H + 2 * pad - kh) // stride + 1
    Wo = (W + 2 * pad - kw) // stride + 1
    xp = jnp.pad(x, ((0, 0), (0, 0), (pad, pad), (pad, pad)))
    cols = []
    for di in range(kh):
        for dj in range(kw):
            cols.append(xp[:, :, di:di + stride * Ho:stride, dj:dj + stride * Wo:stride])
    p = jnp.stack(cols, axis=2)                      # (B, C, kh*kw, Ho, Wo)
    p = p.reshape(B, C * kh * kw, Ho * Wo)           # matches weight.reshape(OC, C*kh*kw)
    return p, Ho, Wo


@partial(jax.jit, static_argnames=("tp",))
def gabor_filter_bank_forward(x, w2d_bf16, tp=256):
    """GaborFilterBank.forward: strided conv with the fixed Gabor bank.

    x        : (B, Cin, H, W)  f32, NCHW
    w2d_bf16 : (OC, Cin*kh*kw) bf16 (reshaped Gabor weight bank)
    tp       : output pixels per grid step.  At production sizes sweep 512/1024/2048;
               keep tp*K*2*2 bytes within VMEM (cap ~1024 on v7x's 64 MiB).
    """
    B = x.shape[0]
    OC, K = w2d_bf16.shape
    patches, Ho, Wo = im2col_channel_major(x, KERNEL_SIZE, KERNEL_SIZE, STRIDE, PAD)
    P = Ho * Wo
    Pp = _round_up(P, tp)
    # Pad only the pixel axis (lane axis); the reduction dim K stays at its true size
    # so no zero bytes are streamed from HBM for it.  bf16 halves the HBM read.
    patches = jnp.pad(patches, ((0, 0), (0, 0), (0, Pp - P))).astype(jnp.bfloat16)
    n_pix_tiles = Pp // tp

    # VMEM budget as a function of the tile size (double-buffered in/out + weights).
    vmem_bytes = 2 * (K * tp * 2 + OC * tp * 4) + OC * K * 2
    vmem_limit = int(min(100 * (1 << 20), max(16 * (1 << 20), 4 * vmem_bytes)))

    cost = pl.CostEstimate(
        flops=int(2 * B * OC * K * Pp),
        transcendentals=0,
        bytes_accessed=int(B * K * Pp * 2 + OC * K * 2 + B * OC * Pp * 4),
    )

    out = pl.pallas_call(
        gabor_conv_kernel,
        out_shape=jax.ShapeDtypeStruct((B, OC, Pp), jnp.float32),
        grid_spec=pltpu.PrefetchScalarGridSpec(
            num_scalar_prefetch=0,
            grid=(B, n_pix_tiles),
            in_specs=[
                pl.BlockSpec((None, K, tp), lambda b, t: (b, 0, t)),
                pl.BlockSpec((OC, K), lambda b, t: (0, 0)),
            ],
            out_specs=pl.BlockSpec((None, OC, tp), lambda b, t: (b, 0, t)),
        ),
        compiler_params=pltpu.CompilerParams(
            dimension_semantics=("parallel", "parallel"),
            vmem_limit_bytes=vmem_limit,
        ),
        cost_estimate=cost,
    )(patches, w2d_bf16)

    # Output is already channel-major -> direct NCHW reshape, no transpose.
    return out[:, :, :P].reshape(B, OC, Ho, Wo)


# ----------------------------------- main -------------------------------------
if __name__ == "__main__":
    # Deterministic weight init, matching the module's __init__ distributions.
    np.random.seed(0)
    w4 = make_gabor_bank_weights(IN_CHANNELS, OUT_CHANNELS, IMAGE_SIZE,
                                 KERNEL_SIZE, VISUAL_DEGREES)
    w2d = jnp.asarray(w4.reshape(OUT_CHANNELS, -1))            # (OC, Cin*kh*kw), f32
    w2d_bf16 = w2d.astype(jnp.bfloat16)

    key = jax.random.PRNGKey(0)
    x = jax.random.normal(key, (BATCH, IN_CHANNELS, IMAGE_SIZE, IMAGE_SIZE),
                          dtype=jnp.float32)

    out = gabor_filter_bank_forward(x, w2d_bf16, tp=256)
    out = jax.block_until_ready(out)

    Ho = (IMAGE_SIZE + 2 * PAD - KERNEL_SIZE) // STRIDE + 1
    assert out.shape == (BATCH, OUT_CHANNELS, Ho, Ho), out.shape

    dn = ('NCHW', 'OIHW', 'NCHW')
    pads = [(PAD, PAD), (PAD, PAD)]

    # (a) Kernel-exact reference: f32 conv on bf16-quantized operands (same numerics
    #     the MXU path sees, exact up to accumulation order).
    ref_q = lax.conv_general_dilated(
        x.astype(jnp.bfloat16).astype(jnp.float32),
        jnp.asarray(w2d_bf16).astype(jnp.float32).reshape(w4.shape),
        (STRIDE, STRIDE), pads, dimension_numbers=dn, precision=lax.Precision.HIGHEST)
    # (b) Module-faithful f32 reference (bf16-operand quantization is the only delta).
    ref_f32 = lax.conv_general_dilated(
        x, jnp.asarray(w4), (STRIDE, STRIDE), pads,
        dimension_numbers=dn, precision=lax.Precision.HIGHEST)
    ref_q, ref_f32 = jax.block_until_ready((ref_q, ref_f32))

    scale = float(jnp.max(jnp.abs(ref_f32))) + 1e-6
    err_kernel = float(jnp.max(jnp.abs(out - ref_q)))
    err_module = float(jnp.max(jnp.abs(out - ref_f32)))
    assert err_kernel <= 2e-3 * scale, \
        f"kernel mismatch vs bf16-operand reference: {err_kernel} (scale {scale})"
    assert err_module <= 2e-2 * scale, \
        f"kernel too far from f32 module reference: {err_module} (scale {scale})"

    print("KERNEL_OK")
</pallas_src>

<mosaic_0001>
module attributes {stable_mosaic.version = 11 : i64} {
  func.func @gabor_conv_kernel(%arg0: i32, %arg1: i32, %arg2: memref<1x147x256xbf16, #tpu.memory_space<vmem>>, %arg3: memref<16x147xbf16, #tpu.memory_space<vmem>>, %arg4: memref<1x16x256xf32, #tpu.memory_space<vmem>>) attributes {dimension_semantics = [#tpu.dimension_semantics<parallel>, #tpu.dimension_semantics<parallel>], iteration_bounds = array<i64: 2, 1>, scalar_prefetch = 0 : i64, scratch_operands = 0 : i64, tpu.core_type = #tpu.core_type<tc>, window_params = [{transform_indices = @transform_0, window_bounds = array<i64: 1, 147, 256>}, {pipeline_mode = #tpu.pipeline_mode<synchronous>, transform_indices = @transform_1, window_bounds = array<i64: 16, 147>}, {transform_indices = @transform_2, window_bounds = array<i64: 1, 16, 256>}]} {
    %c0 = arith.constant 0 : index
    %c0_0 = arith.constant 0 : index
    %0 = vector.load %arg3[%c0, %c0_0] : memref<16x147xbf16, #tpu.memory_space<vmem>>, vector<16x147xbf16>
    %c0_1 = arith.constant 0 : index
    %c0_2 = arith.constant 0 : index
    %c0_3 = arith.constant 0 : index
    %1 = vector.load %arg2[%c0_1, %c0_2, %c0_3] : memref<1x147x256xbf16, #tpu.memory_space<vmem>>, vector<1x147x256xbf16>
    %2 = vector.shape_cast %1 : vector<1x147x256xbf16> to vector<147x256xbf16>
    %cst = arith.constant dense<0.000000e+00> : vector<16x256xf32>
    %3 = tpu.matmul %0, %2, %cst {dimension_numbers = #tpu.dot_dimension_numbers<[1], [0], [0], [1], [0, 0, 1, 1], [], []>} : vector<16x147xbf16>, vector<147x256xbf16>, vector<16x256xf32> -> vector<16x256xf32>
    %c0_4 = arith.constant 0 : index
    %c0_5 = arith.constant 0 : index
    %c0_6 = arith.constant 0 : index
    %4 = vector.load %arg4[%c0_4, %c0_5, %c0_6] : memref<1x16x256xf32, #tpu.memory_space<vmem>>, vector<1x16x256xf32>
    %5 = vector.shape_cast %4 : vector<1x16x256xf32> to vector<16x256xf32>
    %6 = vector.shape_cast %3 : vector<16x256xf32> to vector<1x16x256xf32>
    tpu.vector_store %arg4[%c0_4, %c0_5, %c0_6], %6 {strides = array<i32>} : memref<1x16x256xf32, #tpu.memory_space<vmem>>, vector<1x16x256xf32>,
    return
  }
  func.func @transform_0(%arg0: i32, %arg1: i32) -> (i32, i32, i32) {
    %c0_i32 = arith.constant 0 : i32
    %c0_i32_0 = arith.constant 0 : i32
    return %arg0, %c0_i32, %arg1 : i32, i32, i32
  }
  func.func @transform_1(%arg0: i32, %arg1: i32) -> (i32, i32) {
    %c0_i32 = arith.constant 0 : i32
    %c0_i32_0 = arith.constant 0 : i32
    %c0_i32_1 = arith.constant 0 : i32
    return %c0_i32, %c0_i32_0 : i32, i32
  }
  func.func @transform_2(%arg0: i32, %arg1: i32) -> (i32, i32, i32) {
    %c0_i32 = arith.constant 0 : i32
    %c0_i32_0 = arith.constant 0 : i32
    return %arg0, %c0_i32, %arg1 : i32, i32, i32
  }
}

</mosaic_0001>

<llo_original>
// kernel: gabor_filter_bank_forward.1
$region0: #{gabor_filter_bank_forward.1}
  #allocation0 [shape = 'u32[]', space=smem, size = 0x4, offset = 0x4, fixed_abs, tag = 'smem constant byte address 0x4 - core index']
  #allocation1 [shape = 'u32[144,128]{1,0:T(1,128)}', space=vmem, size = 0x12000, scoped, tag = 'internal scratch']
  %s0 = inlined_call_operand.vmem [shape: bf16[2,147,256], index: 0, kind: input, shape index: {}]
  %s1 = inlined_call_operand.vmem [shape: bf16[16,147], index: 1, kind: input, shape index: {}]
  %s2 = inlined_call_operand.vmem [shape: f32[2,16,256], index: 2, kind: output, shape index: {}]
  %s3 = sld [smem:[#allocation0]]
  $region41: #{gabor_filter_bank_forward.1} parent=0
    _
  %s5 = ssub.s32 1, %s3
  %s6 = scalar_select 0, %s5, %s3
  loop: start=0, step=1, limit=4
  $region2: #{gabor_filter_bank_forward.1} parent=0 // loop_pre_header
    _
  $region3: #{gabor_filter_bank_forward.1} parent=0 // loop_header
    %s8 = sphi 0, %s12
    %p9 = scmp.ge.s32.totalorder %s8, 4
    %s15 = sphi 0, %s27
    %s16 = sphi 0, %s23
    %s17 = sphi 0, %s15
    %s18 = sphi 0, %s16
    %s19 = sphi 0, %s17
    %s20 = sphi 0, %s18
    %s32 = sphi 0, %s34
    %s35 = sphi 0, %s32
    %s36 = sphi 0, %s35
    %s52 = sphi 0, %s36
    %s56 = sphi 0, %s56
    %s58 = sphi 0, %s56
    %s59 = sphi 0, %s58
    %s73 = sphi 0, %s59
    %s81 = sphi 0, %s83
    %s84 = sphi 0, %s81
    %s85 = sphi 0, %s84
    %s101 = sphi 0, %s85
  $region4: #{gabor_filter_bank_forward.1} parent=0 // loop_header_branch
    %11 = sbr.rel (%p9) target = $region8
  $region5: #{gabor_filter_bank_forward.1} parent=0 // loop_body
    %s13 = ssub.s32 %s8, 1
    %s14 = ssub.s32 %s8, 2
    %s21 = sadd.s32 1, %s16
    %p22 = scmp.ge.s32.totalorder %s21, 1
    %s23 = scalar_select %p22, 0, %s21
    %s24 = sadd.s32 1, %s15
    %s25 = scalar_select %p22, %s24, %s15
    %p26 = scmp.ge.s32.totalorder %s25, 2
    %s27 = scalar_select %p26, 0, %s25
    %s28 = ssub.s32 %s15, %s27
    %s29 = ssub.s32 %s16, %s23
    %s30 = sor.u32 %s28, %s29
    %p31 = scmp.eq.s32.totalorder %s30, 0
    %s33 = sadd.s32 %s32, 1
    %s34 = scalar_select %p31, %s32, %s33
    %p37 = pneg %p31
    %p38 = scmp.eq.s32.totalorder %s8, 1
    %p39 = por %p37, %p38
    %p40 = scmp.ne.s32.totalorder %s32, %s35
    %p41 = scmp.eq.s32.totalorder %s8, 0
    %p42 = por %p40, %p41
    %p43 = scmp.ne.s32.totalorder %s32, %s35
    %p44 = scmp.eq.s32.totalorder %s13, 1
    %p45 = por %p43, %p44
    %p46 = scmp.ne.s32.totalorder %s35, %s36
    %p47 = scmp.eq.s32.totalorder %s13, 0
    %p48 = por %p46, %p47
    %p49 = scmp.ne.s32.totalorder %s35, %s36
    %p50 = scmp.eq.s32.totalorder %s14, 1
    %p51 = por %p49, %p50
    %p53 = scmp.ne.s32.totalorder %s36, %s52
    %p54 = scmp.eq.s32.totalorder %s14, 0
    %p55 = por %p53, %p54
    %s57 = sadd.s32 %s56, 1
    %p60 = scmp.eq.s32.totalorder %s8, 1
    %p61 = scmp.ne.s32.totalorder %s56, %s58
    %p62 = scmp.eq.s32.totalorder %s8, 0
    %p63 = por %p61, %p62
    %p64 = scmp.ne.s32.totalorder %s56, %s58
    %p65 = scmp.eq.s32.totalorder %s13, 1
    %p66 = por %p64, %p65
    %p67 = scmp.ne.s32.totalorder %s58, %s59
    %p68 = scmp.eq.s32.totalorder %s13, 0
    %p69 = por %p67, %p68
    %p70 = scmp.ne.s32.totalorder %s58, %s59
    %p71 = scmp.eq.s32.totalorder %s14, 1
    %p72 = por %p70, %p71
    %p74 = scmp.ne.s32.totalorder %s59, %s73
    %p75 = scmp.eq.s32.totalorder %s14, 0
    %p76 = por %p74, %p75
    %s77 = ssub.s32 %s15, %s27
    %s78 = ssub.s32 %s16, %s23
    %s79 = sor.u32 %s77, %s78
    %p80 = scmp.eq.s32.totalorder %s79, 0
    %s82 = sadd.s32 %s81, 1
    %s83 = scalar_select %p80, %s81, %s82
    %p86 = pneg %p80
    %p87 = scmp.eq.s32.totalorder %s8, 1
    %p88 = por %p86, %p87
    %p89 = scmp.ne.s32.totalorder %s81, %s84
    %p90 = scmp.eq.s32.totalorder %s8, 0
    %p91 = por %p89, %p90
    %p92 = scmp.ne.s32.totalorder %s81, %s84
    %p93 = scmp.eq.s32.totalorder %s13, 1
    %p94 = por %p92, %p93
    %p95 = scmp.ne.s32.totalorder %s84, %s85
    %p96 = scmp.eq.s32.totalorder %s13, 0
    %p97 = por %p95, %p96
    %p98 = scmp.ne.s32.totalorder %s84, %s85
    %p99 = scmp.eq.s32.totalorder %s14, 1
    %p100 = por %p98, %p99
    %p102 = scmp.ne.s32.totalorder %s85, %s101
    %p103 = scmp.eq.s32.totalorder %s14, 0
    %p104 = por %p102, %p103
    %p105 = scmp.le.s32.totalorder 1, %s8
    %p106 = scmp.lt.s32.totalorder %s8, 3
    %p107 = pnand %p105, %p106
    %p108 = pneg %p107
    // Predicated region
    $region9: #{gabor_filter_bank_forward.1} parent=5 // pred_check
      _
    $region10: #{gabor_filter_bank_forward.1} parent=5 // pred_check_branch
      %110 = sbr.rel (%p107) target = $region12
    $region11: #{gabor_filter_bank_forward.1} parent=5 // pred_region
      %s111 = ssub.s32 %s8, 1
      // Predicated region
      $region13: #{gabor_filter_bank_forward.1} parent=11 // pred_check
        %p112 = pneg %p69
      $region14: #{gabor_filter_bank_forward.1} parent=11 // pred_check_branch
        %114 = sbr.rel (%p112) target = $region16
      $region15: #{gabor_filter_bank_forward.1} parent=11 // pred_region
        _
      $region16: #{gabor_filter_bank_forward.1} parent=11 // pred_fallthru
        _
    $region12: #{gabor_filter_bank_forward.1} parent=5 // pred_fallthru
      _
    %p115 = scmp.lt.s32.totalorder %s8, 2
    // Predicated region
    $region17: #{gabor_filter_bank_forward.1} parent=5 // pred_check
      %p116 = pneg %p115
    $region18: #{gabor_filter_bank_forward.1} parent=5 // pred_check_branch
      %118 = sbr.rel (%p116) target = $region20
    $region19: #{gabor_filter_bank_forward.1} parent=5 // pred_region
      // Predicated region
      $region21: #{gabor_filter_bank_forward.1} parent=19 // pred_check
        %p119 = pneg %p42
      $region22: #{gabor_filter_bank_forward.1} parent=19 // pred_check_branch
        %121 = sbr.rel (%p119) target = $region24
      $region23: #{gabor_filter_bank_forward.1} parent=19 // pred_region
        %s122 = smul.u32 2, %s16
        %p123 = scmp.lt.s32.totalorder %s15, 1
        %s124 = scalar_select %p123, %s15, 1
        %p125 = scmp.lt.s32.totalorder %s122, 1
        %s126 = scalar_select %p125, %s122, 1
        %s127 = smul.addr %s124, 38
        %s128 = sadd.s32 %s126, %s127
        %s129 = smul.addr %s128, 4
        %s130 = scalar_lea.vmem %s0, %s129
        %s131 = smul.u32 2, %s16
      $region24: #{gabor_filter_bank_forward.1} parent=19 // pred_fallthru
        _
    $region20: #{gabor_filter_bank_forward.1} parent=5 // pred_fallthru
      _
    %p132 = scmp.le.s32.totalorder 1, %s8
    %p133 = scmp.lt.s32.totalorder %s8, 3
    %p134 = pnand %p132, %p133
    %p135 = pneg %p134
    // Predicated region
    $region25: #{gabor_filter_bank_forward.1} parent=5 // pred_check
      _
    $region26: #{gabor_filter_bank_forward.1} parent=5 // pred_check_branch
      %137 = sbr.rel (%p134) target = $region28
    $region27: #{gabor_filter_bank_forward.1} parent=5 // pred_region
      %s138 = ssub.s32 %s8, 1
      %s139 = smul.u32 2, %s18
      %p140 = scmp.lt.s32.totalorder %s17, 1
      %s141 = scalar_select %p140, %s17, 1
      %p142 = scmp.lt.s32.totalorder %s139, 1
      %s143 = scalar_select %p142, %s139, 1
      %s144 = smul.addr %s141, 38
      %s145 = sadd.s32 %s143, %s144
      %s146 = smul.addr %s145, 4
      %s147 = scalar_lea.vmem %s0, %s146
      %p148 = pneg %p48
      %p149 = pneg %p45
      %p150 = pneg %p69
      %p151 = pneg %p66
      %p152 = pneg %p97
      %p153 = pneg %p94
      %s154 = smul.u32 2, %s18
      %p155 = scmp.lt.s32.totalorder %s17, 1
      %s156 = scalar_select %p155, %s17, 1
      %p157 = scmp.lt.s32.totalorder %s154, 1
      %s158 = scalar_select %p157, %s154, 1
      %s159 = smul.addr %s156, 4
      %s160 = sadd.s32 %s158, %s159
      %s161 = smul.addr %s160, 8
      %s162 = scalar_lea.vmem %s2, %s161
      %s163 = smul.u32 2, %s18
      %p164 = scmp.lt.s32.totalorder %s17, 1
      %s165 = scalar_select %p164, %s17, 1
      %p166 = scmp.lt.s32.totalorder %s163, 1
      %s167 = scalar_select %p166, %s163, 1
      %s168 = smul.addr %s165, 38
      %s169 = sadd.s32 %s167, %s168
      %s170 = smul.addr %s169, 4
      %s171 = scalar_lea.vmem %s0, %s170
      %s172 = smul.u32 2, %s18
      %s173 = smul.u32 2, %s18
      %p174 = scmp.lt.s32.totalorder %s17, 1
      %s175 = scalar_select %p174, %s17, 1
      %p176 = scmp.lt.s32.totalorder %s173, 1
      %s177 = scalar_select %p176, %s173, 1
      %s178 = smul.addr %s175, 4
      %s179 = sadd.s32 %s177, %s178
      %s180 = smul.addr %s179, 8
      %s181 = scalar_lea.vmem %s2, %s180
      %s182 = smul.u32 2, %s18
      %v184 = vld [vmem:[%s1] sm:$0xff]
      %v185 = vld [vmem:[%s1 + $0x8] sm:$0xff]
      %v186 = vld [vmem:[%s171] sm:$0xff]
      %v187 = vld [vmem:[%s171 + $0x8] sm:$0xff]
      %v188 = vld [vmem:[%s171 + $0x10] sm:$0xff]
      %v189 = vld [vmem:[%s171 + $0x18] sm:$0xff]
      %v190 = vld [vmem:[%s171 + $0x20] sm:$0xff]
      %v191 = vld [vmem:[%s171 + $0x28] sm:$0xff]
      %v192 = vld [vmem:[%s171 + $0x30] sm:$0xff]
      %v193 = vld [vmem:[%s171 + $0x38] sm:$0xff]
      %v194 = vld [vmem:[%s171 + $0x40] sm:$0xff]
      %v195 = vld [vmem:[%s171 + $0x48] sm:$0xff]
      %v196 = vld [vmem:[%s171 + $0x50] sm:$0xff]
      %v197 = vld [vmem:[%s171 + $0x58] sm:$0xff]
      %v198 = vld [vmem:[%s171 + $0x60] sm:$0xff]
      %v199 = vld [vmem:[%s171 + $0x68] sm:$0xff]
      %v200 = vld [vmem:[%s171 + $0x70] sm:$0xff]
      %v201 = vld [vmem:[%s171 + $0x78] sm:$0xff]
      %v202 = vld [vmem:[%s171 + $0x80] sm:$0xff]
      %v203 = vld [vmem:[%s171 + $0x88] sm:$0xff]
      %v204 = vld [vmem:[%s171 + $0x90] sm:$0x33]
      %v207 = vunpack.c.l.b16 %v184
      %v208 = vunpack.c.h.b16 %v184
      %v209 = vunpack.c.l.b16 %v185
      %v210 = vunpack.c.h.b16 %v185
      %v211 = vpack.c.b16 %v209, %v207
      %v212 = vpack.c.b16 %v210, %v208
      %v233 = vunpack.c.l.b16 %v186
      %v234 = vunpack.c.h.b16 %v186
      %v235 = vunpack.c.l.b16 %v187
      %v236 = vunpack.c.h.b16 %v187
      %v237 = vunpack.c.l.b16 %v188
      %v238 = vunpack.c.h.b16 %v188
      %v239 = vunpack.c.l.b16 %v189
      %v240 = vunpack.c.h.b16 %v189
      %v241 = vunpack.c.l.b16 %v190
      %v242 = vunpack.c.h.b16 %v190
      %v243 = vunpack.c.l.b16 %v191
      %v244 = vunpack.c.h.b16 %v191
      %v245 = vunpack.c.l.b16 %v192
      %v246 = vunpack.c.h.b16 %v192
      %v247 = vunpack.c.l.b16 %v193
      %v248 = vunpack.c.h.b16 %v193
      %v249 = vunpack.c.l.b16 %v194
      %v250 = vunpack.c.h.b16 %v194
      %v251 = vunpack.c.l.b16 %v195
      %v252 = vunpack.c.h.b16 %v195
      %v253 = vunpack.c.l.b16 %v196
      %v254 = vunpack.c.h.b16 %v196
      %v255 = vunpack.c.l.b16 %v197
      %v256 = vunpack.c.h.b16 %v197
      %v257 = vunpack.c.l.b16 %v198
      %v258 = vunpack.c.h.b16 %v198
      %v259 = vunpack.c.l.b16 %v199
      %v260 = vunpack.c.h.b16 %v199
      %v261 = vunpack.c.l.b16 %v200
      %v262 = vunpack.c.h.b16 %v200
      %v263 = vunpack.c.l.b16 %v201
      %v264 = vunpack.c.h.b16 %v201
      %v265 = vunpack.c.l.b16 %v202
      %v266 = vunpack.c.h.b16 %v202
      %v267 = vunpack.c.l.b16 %v203
      %v268 = vunpack.c.h.b16 %v203
      %v269 = vunpack.c.l.b16 %v204
      %v270 = vunpack.c.h.b16 %v204
      %v271 = vpack.c.b16 %v235, %v233
      %v272 = vpack.c.b16 %v236, %v234
      %v273 = vpack.c.b16 %v239, %v237
      %v274 = vpack.c.b16 %v240, %v238
      %v275 = vpack.c.b16 %v243, %v241
      %v276 = vpack.c.b16 %v244, %v242
      %v277 = vpack.c.b16 %v247, %v245
      %v278 = vpack.c.b16 %v248, %v246
      %v279 = vpack.c.b16 %v251, %v249
      %v280 = vpack.c.b16 %v252, %v250
      %v281 = vpack.c.b16 %v255, %v253
      %v282 = vpack.c.b16 %v256, %v254
      %v283 = vpack.c.b16 %v259, %v257
      %v284 = vpack.c.b16 %v260, %v258
      %v285 = vpack.c.b16 %v263, %v261
      %v286 = vpack.c.b16 %v264, %v262
      %v287 = vpack.c.b16 %v267, %v265
      %v288 = vpack.c.b16 %v268, %v266
      %v289 = vpack.c.b16 %v269, %v269
      %v290 = vpack.c.b16 %v270, %v270
      %vm309 = vcmask 154624
      %v311 = vsel %vm309, %v212, 0
      %vm313 = vcmask 1040384
      %vm314 = vcmask 1041408
      %v315 = vsel %vm313, 4294967295, 65535
      %v316 = vsel %vm314, %v315, 0
      %v318 = vand.u32 %v289, %v316
      %v321 = vand.u32 %v290, %v316
      %323 = vmatprep.subr.bf16.mxu0 %v286
      %324 = vmatpush1.bf16.msra.mxu0 %v285
      %325 = vmatprep.subr.bf16.mxu0 %v284
      %326 = vmatpush1.bf16.msra.mxu0 %v283
      %327 = vmatprep.subr.bf16.mxu0 %v282
      %328 = vmatpush1.bf16.msra.mxu0 %v281
      %329 = vmatprep.subr.bf16.mxu0 %v280
      %330 = vmatpush1.bf16.msra.mxu0 %v279
      %331 = vmatprep.subr.bf16.mxu0 %v278
      %332 = vmatpush1.bf16.msra.mxu0 %v277
      %333 = vmatprep.subr.bf16.mxu0 %v276
      %334 = vmatpush1.bf16.msra.mxu0 %v275
      %335 = vmatprep.subr.bf16.mxu0 %v274
      %336 = vmatpush1.bf16.msra.mxu0 %v273
      %337 = vmatprep.subr.bf16.mxu0 %v272
      %338 = vmatpush1.bf16.msra.mxu0 %v271
      %339 = vmatprep.subr.bf16.mxu0 0
      %340 = vmatpush2.bf16.msra.mxu0 0
      %341 = vmatprep.subr.bf16.mxu0 0
      %342 = vmatpush2.bf16.msra.mxu0 0
      %343 = vmatprep.subr.bf16.mxu0 0
      %344 = vmatpush2.bf16.msra.mxu0 0
      %345 = vmatprep.subr.bf16.mxu0 0
      %346 = vmatpush2.bf16.msra.mxu0 0
      %347 = vmatprep.subr.bf16.mxu0 0
      %348 = vmatpush2.bf16.msra.mxu0 0
      %349 = vmatprep.subr.bf16.mxu0 0
      %350 = vmatpush2.bf16.msra.mxu0 0
      %351 = vmatprep.subr.bf16.mxu0 %v321
      %352 = vmatpush2.bf16.msra.mxu0 %v318
      %353 = vmatprep.subr.bf16.mxu0 %v288
      %354 = vmatpush2.bf16.msra.mxu0 %v287
      %355 = vmatprep.mubr.bf16.mxu0 %v311
      %356 = vmatmul.mubr.bf16.gmra.mxu0 %v211
      %v357 = vpop.f32.mrf.mxu0
      %v358 = vadd.f32 0.0, %v357
      %v359 = vpop.f32.mrf.mxu0
      %v360 = vadd.f32 0.0, %v359
      %v361 = vpop.f32.mrf.mxu0
      %v362 = vadd.f32 0.0, %v361
      %v363 = vpop.f32.mrf.mxu0
      %v364 = vadd.f32 0.0, %v363
      %365 = vdwg.mxu0
      %366 = vst [vmem:[%s181] sm:$0xff] %v358
      %367 = vst [vmem:[%s181 + $0x8] sm:$0xff] %v360
      %368 = vst [vmem:[%s181 + $0x10] sm:$0xff] %v362
      %369 = vst [vmem:[%s181 + $0x18] sm:$0xff] %v364
      %s370 = smul.u32 2, %s18
      %p371 = scmp.lt.s32.totalorder %s17, 1
      %s372 = scalar_select %p371, %s17, 1
      %p373 = scmp.lt.s32.totalorder %s370, 1
      %s374 = scalar_select %p373, %s370, 1
      %s375 = smul.addr %s372, 4
      %s376 = sadd.s32 %s374, %s375
      %s377 = smul.addr %s376, 8
      %s378 = scalar_lea.vmem %s2, %s377
      // Predicated region
      $region29: #{gabor_filter_bank_forward.1} parent=27 // pred_check
        %p379 = pneg %p94
      $region30: #{gabor_filter_bank_forward.1} parent=27 // pred_check_branch
        %381 = sbr.rel (%p379) target = $region32
      $region31: #{gabor_filter_bank_forward.1} parent=27 // pred_region
        %s382 = smul.u32 2, %s18
      $region32: #{gabor_filter_bank_forward.1} parent=27 // pred_fallthru
        _
    $region28: #{gabor_filter_bank_forward.1} parent=5 // pred_fallthru
      _
    %p383 = scmp.le.s32.totalorder 2, %s8
    // Predicated region
    $region33: #{gabor_filter_bank_forward.1} parent=5 // pred_check
      %p384 = pneg %p383
    $region34: #{gabor_filter_bank_forward.1} parent=5 // pred_check_branch
      %386 = sbr.rel (%p384) target = $region36
    $region35: #{gabor_filter_bank_forward.1} parent=5 // pred_region
      %s387 = ssub.s32 %s8, 2
      // Predicated region
      $region37: #{gabor_filter_bank_forward.1} parent=35 // pred_check
        %p388 = pneg %p100
      $region38: #{gabor_filter_bank_forward.1} parent=35 // pred_check_branch
        %390 = sbr.rel (%p388) target = $region40
      $region39: #{gabor_filter_bank_forward.1} parent=35 // pred_region
        %s391 = smul.u32 2, %s20
        %p392 = scmp.lt.s32.totalorder %s19, 1
        %s393 = scalar_select %p392, %s19, 1
        %p394 = scmp.lt.s32.totalorder %s391, 1
        %s395 = scalar_select %p394, %s391, 1
        %s396 = smul.addr %s393, 4
        %s397 = sadd.s32 %s395, %s396
        %s398 = smul.addr %s397, 8
        %s399 = scalar_lea.vmem %s2, %s398
      $region40: #{gabor_filter_bank_forward.1} parent=35 // pred_fallthru
        _
    $region36: #{gabor_filter_bank_forward.1} parent=5 // pred_fallthru
      _
  $region6: #{gabor_filter_bank_forward.1} parent=0 // loop_footer
    %s12 = sadd.s32 1, %s8
  $region7: #{gabor_filter_bank_forward.1} parent=0 // loop_footer_branch
    %7 = sbr.rel target = $region3
  $region8: #{gabor_filter_bank_forward.1} parent=0 // loop_exit
    _

</llo_original>
